<compile_context>
chip_gen: v7x
topology: tpu7x:2x2x1
jax: 0.10.0
libtpu: 0.0.40
codegen_flags: <defaults>
</compile_context>

<pallas_src>
import jax
import jax.numpy as jnp
from jax.experimental import pallas as pl
from jax.experimental.pallas import tpu as pltpu


def _round_up(x, m):
    return (x + m - 1) // m * m


def _hbmnet_kernel(xv_ref, xt_ref, w1_ref, b1_ref, wcf_ref, bcf_ref, o_ref):
    # Lane-concat the two feature streams in VMEM, cast to bf16 for the MXU.
    x = jnp.concatenate([xv_ref[...], xt_ref[...]], axis=1).astype(jnp.bfloat16)
    # Layer 1: single block-diagonal matmul (BN scale folded into w1), f32 acc.
    h = jnp.dot(x, w1_ref[...], preferred_element_type=jnp.float32)
    h = jnp.maximum(h + b1_ref[...], 0.0).astype(jnp.bfloat16)
    # Classifier: K=256 matmul into a lane-dense 128-wide padded output.
    out = jnp.dot(h, wcf_ref[...], preferred_element_type=jnp.float32) + bcf_ref[...]
    o_ref[...] = out.astype(o_ref.dtype)


def hbmnet_tv_forward(vfeat, tfeat, params, *, max_tile_b=1024):
    """vfeat: (B, vdim), tfeat: (B, tdim) float32. Returns (B, nclasses) float32."""
    B, vdim = vfeat.shape
    tdim = tfeat.shape[1]
    hv = params["w1v"].shape[1]          # hidden width of visual branch
    ht = params["w1t"].shape[1]          # hidden width of text branch
    hidden = hv + ht
    nclasses = params["wcf"].shape[1]
    eps = 1e-5

    # ---- fold BatchNorm1d (running stats, eval) into the linear weights ----
    def fold(w, b, gamma, beta, mean, var):
        scale = gamma * jax.lax.rsqrt(var + eps)     # (h,)
        w_f = w * scale[None, :]                     # per-output-column scale
        b_f = (b - mean) * scale + beta              # bias + BN shift
        return w_f, b_f

    w1v_f, b1v_f = fold(params["w1v"], params["b1v"], params["bn_v_gamma"],
                        params["bn_v_beta"], params["bn_v_mean"], params["bn_v_var"])
    w1t_f, b1t_f = fold(params["w1t"], params["b1t"], params["bn_t_gamma"],
                        params["bn_t_beta"], params["bn_t_mean"], params["bn_t_var"])

    # ---- fuse the two branch matmuls into one block-diagonal W1 ----
    kin = vdim + tdim
    w1 = jnp.zeros((kin, hidden), jnp.float32)
    w1 = w1.at[:vdim, :hv].set(w1v_f)
    w1 = w1.at[vdim:, hv:].set(w1t_f)
    b1 = jnp.concatenate([b1v_f, b1t_f]).reshape(1, hidden)

    # ---- lane-dense classifier output: pad nclasses up to a multiple of 128 ----
    n_pad = max(128, _round_up(nclasses, 128))
    wcf = jnp.zeros((hidden, n_pad), jnp.float32).at[:, :nclasses].set(params["wcf"])
    bcf = jnp.zeros((1, n_pad), jnp.float32).at[:, :nclasses].set(params["bcf"])

    # bf16 weights for the MXU (biases stay f32; epilogue is f32).
    w1 = w1.astype(jnp.bfloat16)
    wcf = wcf.astype(jnp.bfloat16)

    # ---- batch tiling: no pad, partial last block is masked by Pallas ----
    tile_b = min(_round_up(B, 8), max_tile_b)
    # For moderate B make sure there are >= 2 grid steps so both v7x TCs get work.
    if B > 128 and pl.cdiv(B, tile_b) < 2:
        tile_b = _round_up(pl.cdiv(B, 2), 8)
    grid = (pl.cdiv(B, tile_b),)

    flops = 2 * B * (kin * hidden + hidden * n_pad)
    bytes_accessed = (4 * B * kin                       # streamed activations (f32)
                      + 2 * B * n_pad                   # bf16 output
                      + 2 * (kin * hidden + hidden * n_pad)   # bf16 weights
                      + 4 * (hidden + n_pad))           # f32 biases

    # VMEM footprint (double-buffered tiles + resident weights) is ~1 MB for
    # tile_b=1024, well under every generation's scoped default -> no
    # vmem_limit_bytes override needed.
    out = pl.pallas_call(
        _hbmnet_kernel,
        out_shape=jax.ShapeDtypeStruct((B, n_pad), jnp.bfloat16),
        grid=grid,
        in_specs=[
            pl.BlockSpec((tile_b, vdim), lambda i: (i, 0)),    # streamed vfeat
            pl.BlockSpec((tile_b, tdim), lambda i: (i, 0)),    # streamed tfeat
            pl.BlockSpec((kin, hidden), lambda i: (0, 0)),     # resident fused W1 (bf16)
            pl.BlockSpec((1, hidden), lambda i: (0, 0)),       # resident fused b1 (f32)
            pl.BlockSpec((hidden, n_pad), lambda i: (0, 0)),   # resident padded Wcf (bf16)
            pl.BlockSpec((1, n_pad), lambda i: (0, 0)),        # resident padded bcf (f32)
        ],
        out_specs=pl.BlockSpec((tile_b, n_pad), lambda i: (i, 0)),
        compiler_params=pltpu.CompilerParams(
            dimension_semantics=("parallel",)),
        cost_estimate=pl.CostEstimate(flops=flops, transcendentals=0,
                                      bytes_accessed=bytes_accessed),
    )(vfeat, tfeat, w1, b1, wcf, bcf)

    # Slice + upcast stay inside the caller's jit -> fused with the kernel output.
    return out[:, :nclasses].astype(jnp.float32)


def init_params(key, vdim, tdim, nclasses):
    ks = jax.random.split(key, 3)

    def lin(k, fan_in, fan_out):
        bound = 1.0 / jnp.sqrt(fan_in)
        kw, kb = jax.random.split(k)
        w = jax.random.uniform(kw, (fan_in, fan_out), jnp.float32, -bound, bound)
        b = jax.random.uniform(kb, (fan_out,), jnp.float32, -bound, bound)
        return w, b

    w1v, b1v = lin(ks[0], vdim, 128)
    w1t, b1t = lin(ks[1], tdim, 128)
    wcf, bcf = lin(ks[2], 256, nclasses)
    return dict(
        w1v=w1v, b1v=b1v, w1t=w1t, b1t=b1t, wcf=wcf, bcf=bcf,
        bn_v_gamma=jnp.ones((128,), jnp.float32),
        bn_v_beta=jnp.zeros((128,), jnp.float32),
        bn_v_mean=jnp.zeros((128,), jnp.float32),
        bn_v_var=jnp.ones((128,), jnp.float32),
        bn_t_gamma=jnp.ones((128,), jnp.float32),
        bn_t_beta=jnp.zeros((128,), jnp.float32),
        bn_t_mean=jnp.zeros((128,), jnp.float32),
        bn_t_var=jnp.ones((128,), jnp.float32),
    )


def reference_forward(vfeat, tfeat, params):
    eps = 1e-5
    x1 = vfeat @ params["w1v"] + params["b1v"]
    x1 = (x1 - params["bn_v_mean"]) / jnp.sqrt(params["bn_v_var"] + eps) \
         * params["bn_v_gamma"] + params["bn_v_beta"]
    x1 = jnp.maximum(x1, 0.0)
    x2 = tfeat @ params["w1t"] + params["b1t"]
    x2 = (x2 - params["bn_t_mean"]) / jnp.sqrt(params["bn_t_var"] + eps) \
         * params["bn_t_gamma"] + params["bn_t_beta"]
    x2 = jnp.maximum(x2, 0.0)
    return jnp.concatenate([x1, x2], axis=1) @ params["wcf"] + params["bcf"]


if __name__ == "__main__":
    B, vdim, tdim, nclasses = 8, 32, 48, 4
    key = jax.random.PRNGKey(0)
    kp, kv, kt = jax.random.split(key, 3)

    params = init_params(kp, vdim, tdim, nclasses)
    vfeat = jax.random.normal(kv, (B, vdim), jnp.float32)   # vfeat['tweet']
    tfeat = jax.random.normal(kt, (B, tdim), jnp.float32)   # tfeat['tweet']

    fwd = jax.jit(hbmnet_tv_forward)
    out = jax.block_until_ready(fwd(vfeat, tfeat, params))

    ref = reference_forward(vfeat, tfeat, params)
    assert out.shape == (B, nclasses)
    # bf16 MXU path -> looser tolerance than the f32 reference.
    assert jnp.allclose(out, ref, atol=5e-2, rtol=5e-2)
    print("KERNEL_OK")
</pallas_src>

<mosaic_0001>
module attributes {stable_mosaic.version = 11 : i64} {
  func.func @_hbmnet_kernel(%arg0: i32, %arg1: memref<8x32xf32, #tpu.memory_space<vmem>>, %arg2: memref<8x48xf32, #tpu.memory_space<vmem>>, %arg3: memref<80x256xbf16, #tpu.memory_space<vmem>>, %arg4: memref<1x256xf32, #tpu.memory_space<vmem>>, %arg5: memref<256x128xbf16, #tpu.memory_space<vmem>>, %arg6: memref<1x128xf32, #tpu.memory_space<vmem>>, %arg7: memref<8x128xbf16, #tpu.memory_space<vmem>>) attributes {dimension_semantics = [#tpu.dimension_semantics<parallel>], iteration_bounds = array<i64: 1>, scalar_prefetch = 0 : i64, scratch_operands = 0 : i64, tpu.core_type = #tpu.core_type<tc>, window_params = [{transform_indices = @transform_0, window_bounds = array<i64: 8, 32>}, {transform_indices = @transform_1, window_bounds = array<i64: 8, 48>}, {pipeline_mode = #tpu.pipeline_mode<synchronous>, transform_indices = @transform_2, window_bounds = array<i64: 80, 256>}, {pipeline_mode = #tpu.pipeline_mode<synchronous>, transform_indices = @transform_3, window_bounds = array<i64: 1, 256>}, {pipeline_mode = #tpu.pipeline_mode<synchronous>, transform_indices = @transform_4, window_bounds = array<i64: 256, 128>}, {pipeline_mode = #tpu.pipeline_mode<synchronous>, transform_indices = @transform_5, window_bounds = array<i64: 1, 128>}, {transform_indices = @transform_6, window_bounds = array<i64: 8, 128>}]} {
    %c0 = arith.constant 0 : index
    %c0_0 = arith.constant 0 : index
    %0 = vector.load %arg1[%c0, %c0_0] : memref<8x32xf32, #tpu.memory_space<vmem>>, vector<8x32xf32>
    %c0_1 = arith.constant 0 : index
    %c0_2 = arith.constant 0 : index
    %1 = vector.load %arg2[%c0_1, %c0_2] : memref<8x48xf32, #tpu.memory_space<vmem>>, vector<8x48xf32>
    %2 = tpu.concatenate %0, %1 in 1 : vector<8x32xf32>, vector<8x48xf32> -> vector<8x80xf32>
    %3 = arith.truncf %2 : vector<8x80xf32> to vector<8x80xbf16>
    %c0_3 = arith.constant 0 : index
    %c0_4 = arith.constant 0 : index
    %4 = vector.load %arg3[%c0_3, %c0_4] : memref<80x256xbf16, #tpu.memory_space<vmem>>, vector<80x256xbf16>
    %cst = arith.constant dense<0.000000e+00> : vector<8x256xf32>
    %5 = tpu.matmul %3, %4, %cst {dimension_numbers = #tpu.dot_dimension_numbers<[1], [0], [0], [1], [0, 0, 1, 1], [], []>} : vector<8x80xbf16>, vector<80x256xbf16>, vector<8x256xf32> -> vector<8x256xf32>
    %c0_5 = arith.constant 0 : index
    %c0_6 = arith.constant 0 : index
    %6 = vector.load %arg4[%c0_5, %c0_6] : memref<1x256xf32, #tpu.memory_space<vmem>>, vector<1x256xf32>
    %7 = vector.broadcast %6 : vector<1x256xf32> to vector<8x256xf32>
    %8 = arith.addf %5, %7 : vector<8x256xf32>
    %cst_7 = arith.constant 0.000000e+00 : f32
    %9 = vector.broadcast %cst_7 : f32 to vector<8x256xf32>
    %10 = arith.maximumf %8, %9 : vector<8x256xf32>
    %11 = arith.truncf %10 : vector<8x256xf32> to vector<8x256xbf16>
    %c0_8 = arith.constant 0 : index
    %c0_9 = arith.constant 0 : index
    %12 = vector.load %arg5[%c0_8, %c0_9] : memref<256x128xbf16, #tpu.memory_space<vmem>>, vector<256x128xbf16>
    %cst_10 = arith.constant dense<0.000000e+00> : vector<8x128xf32>
    %13 = tpu.matmul %11, %12, %cst_10 {dimension_numbers = #tpu.dot_dimension_numbers<[1], [0], [0], [1], [0, 0, 1, 1], [], []>} : vector<8x256xbf16>, vector<256x128xbf16>, vector<8x128xf32> -> vector<8x128xf32>
    %c0_11 = arith.constant 0 : index
    %c0_12 = arith.constant 0 : index
    %14 = vector.load %arg6[%c0_11, %c0_12] : memref<1x128xf32, #tpu.memory_space<vmem>>, vector<1x128xf32>
    %15 = vector.broadcast %14 : vector<1x128xf32> to vector<8x128xf32>
    %16 = arith.addf %13, %15 : vector<8x128xf32>
    %17 = arith.truncf %16 : vector<8x128xf32> to vector<8x128xbf16>
    %c0_13 = arith.constant 0 : index
    %c0_14 = arith.constant 0 : index
    %18 = vector.load %arg7[%c0_13, %c0_14] : memref<8x128xbf16, #tpu.memory_space<vmem>>, vector<8x128xbf16>
    tpu.vector_store %arg7[%c0_13, %c0_14], %17 {strides = array<i32>} : memref<8x128xbf16, #tpu.memory_space<vmem>>, vector<8x128xbf16>,
    return
  }
  func.func @transform_0(%arg0: i32) -> (i32, i32) {
    %c0_i32 = arith.constant 0 : i32
    %c0_i32_0 = arith.constant 0 : i32
    return %arg0, %c0_i32 : i32, i32
  }
  func.func @transform_1(%arg0: i32) -> (i32, i32) {
    %c0_i32 = arith.constant 0 : i32
    %c0_i32_0 = arith.constant 0 : i32
    return %arg0, %c0_i32 : i32, i32
  }
  func.func @transform_2(%arg0: i32) -> (i32, i32) {
    %c0_i32 = arith.constant 0 : i32
    %c0_i32_0 = arith.constant 0 : i32
    %c0_i32_1 = arith.constant 0 : i32
    return %c0_i32, %c0_i32_0 : i32, i32
  }
  func.func @transform_3(%arg0: i32) -> (i32, i32) {
    %c0_i32 = arith.constant 0 : i32
    %c0_i32_0 = arith.constant 0 : i32
    %c0_i32_1 = arith.constant 0 : i32
    return %c0_i32, %c0_i32_0 : i32, i32
  }
  func.func @transform_4(%arg0: i32) -> (i32, i32) {
    %c0_i32 = arith.constant 0 : i32
    %c0_i32_0 = arith.constant 0 : i32
    %c0_i32_1 = arith.constant 0 : i32
    return %c0_i32, %c0_i32_0 : i32, i32
  }
  func.func @transform_5(%arg0: i32) -> (i32, i32) {
    %c0_i32 = arith.constant 0 : i32
    %c0_i32_0 = arith.constant 0 : i32
    %c0_i32_1 = arith.constant 0 : i32
    return %c0_i32, %c0_i32_0 : i32, i32
  }
  func.func @transform_6(%arg0: i32) -> (i32, i32) {
    %c0_i32 = arith.constant 0 : i32
    %c0_i32_0 = arith.constant 0 : i32
    return %arg0, %c0_i32 : i32, i32
  }
}

</mosaic_0001>

<llo_original>
// kernel: hbmnet_tv_forward.1
$region0: #{hbmnet_tv_forward.1}
  #allocation0 [shape = 'u32[]', space=smem, size = 0x4, offset = 0x4, fixed_abs, tag = 'smem constant byte address 0x4 - core index']
  #allocation1 [shape = 'u32[144,128]{1,0:T(1,128)}', space=vmem, size = 0x12000, scoped, tag = 'internal scratch']
  %s0 = inlined_call_operand.vmem [shape: f32[8,32], index: 0, kind: input, shape index: {}]
  %s1 = inlined_call_operand.vmem [shape: f32[8,48], index: 1, kind: input, shape index: {}]
  %s2 = inlined_call_operand.vmem [shape: bf16[80,256], index: 2, kind: input, shape index: {}]
  %s3 = inlined_call_operand.vmem [shape: f32[1,256], index: 3, kind: input, shape index: {}]
  %s4 = inlined_call_operand.vmem [shape: bf16[256,128], index: 4, kind: input, shape index: {}]
  %s5 = inlined_call_operand.vmem [shape: f32[1,128], index: 5, kind: input, shape index: {}]
  %s6 = inlined_call_operand.vmem [shape: bf16[8,128], index: 6, kind: output, shape index: {}]
  %s7 = sld [smem:[#allocation0]]
  $region34: #{hbmnet_tv_forward.1} parent=0
    _
  %s9 = ssub.s32 1, %s7
  %s10 = scalar_select 0, %s9, %s7
  // Predicated region
  $region2: #{hbmnet_tv_forward.1} parent=0 // pred_check
    _
  $region3: #{hbmnet_tv_forward.1} parent=0 // pred_check_branch
    %12 = sbr.rel (0) target = $region5
  $region4: #{hbmnet_tv_forward.1} parent=0 // pred_region
    _
  $region5: #{hbmnet_tv_forward.1} parent=0 // pred_fallthru
    _
  // Predicated region
  $region6: #{hbmnet_tv_forward.1} parent=0 // pred_check
    _
  $region7: #{hbmnet_tv_forward.1} parent=0 // pred_check_branch
    %14 = sbr.rel (0) target = $region9
  $region8: #{hbmnet_tv_forward.1} parent=0 // pred_region
    _
  $region9: #{hbmnet_tv_forward.1} parent=0 // pred_fallthru
    _
  // Predicated region
  $region10: #{hbmnet_tv_forward.1} parent=0 // pred_check
    _
  $region11: #{hbmnet_tv_forward.1} parent=0 // pred_check_branch
    %16 = sbr.rel (0) target = $region13
  $region12: #{hbmnet_tv_forward.1} parent=0 // pred_region
    _
  $region13: #{hbmnet_tv_forward.1} parent=0 // pred_fallthru
    _
  // Predicated region
  $region14: #{hbmnet_tv_forward.1} parent=0 // pred_check
    _
  $region15: #{hbmnet_tv_forward.1} parent=0 // pred_check_branch
    %18 = sbr.rel (0) target = $region17
  $region16: #{hbmnet_tv_forward.1} parent=0 // pred_region
    _
  $region17: #{hbmnet_tv_forward.1} parent=0 // pred_fallthru
    _
  // Predicated region
  $region18: #{hbmnet_tv_forward.1} parent=0 // pred_check
    _
  $region19: #{hbmnet_tv_forward.1} parent=0 // pred_check_branch
    %20 = sbr.rel (0) target = $region21
  $region20: #{hbmnet_tv_forward.1} parent=0 // pred_region
    _
  $region21: #{hbmnet_tv_forward.1} parent=0 // pred_fallthru
    _
  // Predicated region
  $region22: #{hbmnet_tv_forward.1} parent=0 // pred_check
    _
  $region23: #{hbmnet_tv_forward.1} parent=0 // pred_check_branch
    %22 = sbr.rel (0) target = $region25
  $region24: #{hbmnet_tv_forward.1} parent=0 // pred_region
    _
  $region25: #{hbmnet_tv_forward.1} parent=0 // pred_fallthru
    _
  %v24 = vld [vmem:[%s0] sm:$0xff]
  %v25 = vld [vmem:[%s1] sm:$0xff]
  %27 = vrot.lane.b32.xlu0 %v25, 32
  %v28 = vpop.permute.xlu0 %27
  %vm30 = vcmask 261120
  %v31 = vsel %vm30, %v24, %v28
  %v32 = vpack.c.bf16 %v31, %v31
  %v33 = vld [vmem:[%s2] sm:$0xff]
  %v34 = vld [vmem:[%s2 + $0x8] sm:$0xff]
  %v35 = vld [vmem:[%s2 + $0x10] sm:$0xff]
  %v36 = vld [vmem:[%s2 + $0x18] sm:$0xff]
  %v37 = vld [vmem:[%s2 + $0x20] sm:$0xff]
  %v38 = vld [vmem:[%s2 + $0x28] sm:$0xff]
  %v39 = vld [vmem:[%s2 + $0x30] sm:$0xff]
  %v40 = vld [vmem:[%s2 + $0x38] sm:$0xff]
  %v41 = vld [vmem:[%s2 + $0x40] sm:$0xff]
  %v42 = vld [vmem:[%s2 + $0x48] sm:$0xff]
  %v43 = vld [vmem:[%s3] sm:$0x3]
  %v45 = vlaneseq
  %v46 = vshrl.u32 %v45, 7
  %v47 = vsub.s32 0, %v46
  %v48 = vrot.slane %v43, %v47
  %v49 = vlaneseq
  %v50 = vshrl.u32 %v49, 7
  %v51 = vsub.s32 1, %v50
  %v52 = vrot.slane %v43, %v51
  %v65 = vunpack.c.l.b16 %v33
  %v66 = vunpack.c.h.b16 %v33
  %v67 = vunpack.c.l.b16 %v34
  %v68 = vunpack.c.h.b16 %v34
  %v69 = vunpack.c.l.b16 %v35
  %v70 = vunpack.c.h.b16 %v35
  %v71 = vunpack.c.l.b16 %v36
  %v72 = vunpack.c.h.b16 %v36
  %v73 = vunpack.c.l.b16 %v37
  %v74 = vunpack.c.h.b16 %v37
  %v75 = vunpack.c.l.b16 %v38
  %v76 = vunpack.c.h.b16 %v38
  %v77 = vunpack.c.l.b16 %v39
  %v78 = vunpack.c.h.b16 %v39
  %v79 = vunpack.c.l.b16 %v40
  %v80 = vunpack.c.h.b16 %v40
  %v81 = vunpack.c.l.b16 %v41
  %v82 = vunpack.c.h.b16 %v41
  %v83 = vunpack.c.l.b16 %v42
  %v84 = vunpack.c.h.b16 %v42
  %v85 = vpack.c.b16 %v67, %v65
  %v86 = vpack.c.b16 %v68, %v66
  %v87 = vpack.c.b16 %v71, %v69
  %v88 = vpack.c.b16 %v72, %v70
  %v89 = vpack.c.b16 %v75, %v73
  %v90 = vpack.c.b16 %v76, %v74
  %v91 = vpack.c.b16 %v79, %v77
  %v92 = vpack.c.b16 %v80, %v78
  %v93 = vpack.c.b16 %v83, %v81
  %v94 = vpack.c.b16 %v84, %v82
  %vm105 = vcmask 654336
  %v107 = vsel %vm105, %v32, 0
  %109 = vmatprep.subr.bf16.mxu0 %v86
  %110 = vmatpush1.bf16.msra.mxu0 %v85
  %111 = vmatprep.subr.bf16.mxu0 %v88
  %112 = vmatpush1.bf16.msra.mxu0 %v87
  %113 = vmatprep.subr.bf16.mxu0 %v90
  %114 = vmatpush1.bf16.msra.mxu0 %v89
  %115 = vmatprep.subr.bf16.mxu0 %v92
  %116 = vmatpush1.bf16.msra.mxu0 %v91
  %117 = vmatprep.subr.bf16.mxu0 %v94
  %118 = vmatpush1.bf16.msra.mxu0 %v93
  %119 = vmatprep.subr.bf16.mxu0 0
  %120 = vmatpush1.bf16.msra.mxu0 0
  %121 = vmatprep.subr.bf16.mxu0 0
  %122 = vmatpush1.bf16.msra.mxu0 0
  %123 = vmatprep.subr.bf16.mxu0 0
  %124 = vmatpush1.bf16.msra.mxu0 0
  %125 = vmatprep.subr.bf16.mxu0 0
  %126 = vmatpush1.bf16.msra.mxu0 0
  %127 = vmatprep.subr.bf16.mxu0 0
  %128 = vmatpush1.bf16.msra.mxu0 0
  %129 = vmatprep.subr.bf16.mxu0 0
  %130 = vmatpush1.bf16.msra.mxu0 0
  %131 = vmatprep.subr.bf16.mxu0 0
  %132 = vmatpush1.bf16.msra.mxu0 0
  %133 = vmatprep.subr.bf16.mxu0 0
  %134 = vmatpush1.bf16.msra.mxu0 0
  %135 = vmatprep.subr.bf16.mxu0 0
  %136 = vmatpush1.bf16.msra.mxu0 0
  %137 = vmatprep.subr.bf16.mxu0 0
  %138 = vmatpush1.bf16.msra.mxu0 0
  %139 = vmatprep.subr.bf16.mxu0 0
  %140 = vmatpush1.bf16.msra.mxu0 0
  %141 = vmatprep.mubr.bf16.mxu0 0
  %142 = vmatmul.mubr.bf16.gmra.mrb[0].mxu0 %v107
  %v143 = vpop.f32.mrb[0].mxu0
  %v144 = vadd.f32 %v48, %v143
  %v145 = vpop.f32.mrb[0].mxu0
  %v146 = vadd.f32 %v52, %v145
  %v147 = vpop.f32.mrb[0].mxu0
  %v148 = vpop.f32.mrb[0].mxu0
  %149 = vdwg.mxu0
  %v150 = vmax.f32 %v144, 0.0
  %v151 = vmax.f32 %v146, 0.0
  %v152 = vpack.c.bf16 %v150, %v150
  %v153 = vpack.c.bf16 %v151, %v151
  %v154 = vld [vmem:[%s4] sm:$0xf]
  %v155 = vld [vmem:[%s4 + $0x4] sm:$0xf]
  %v156 = vld [vmem:[%s4 + $0x8] sm:$0xf]
  %v157 = vld [vmem:[%s4 + $0xc] sm:$0xf]
  %v158 = vld [vmem:[%s4 + $0x10] sm:$0xf]
  %v159 = vld [vmem:[%s4 + $0x14] sm:$0xf]
  %v160 = vld [vmem:[%s4 + $0x18] sm:$0xf]
  %v161 = vld [vmem:[%s4 + $0x1c] sm:$0xf]
  %v162 = vld [vmem:[%s4 + $0x20] sm:$0xf]
  %v163 = vld [vmem:[%s4 + $0x24] sm:$0xf]
  %v164 = vld [vmem:[%s4 + $0x28] sm:$0xf]
  %v165 = vld [vmem:[%s4 + $0x2c] sm:$0xf]
  %v166 = vld [vmem:[%s4 + $0x30] sm:$0xf]
  %v167 = vld [vmem:[%s4 + $0x34] sm:$0xf]
  %v168 = vld [vmem:[%s4 + $0x38] sm:$0xf]
  %v169 = vld [vmem:[%s4 + $0x3c] sm:$0xf]
  %v170 = vld [vmem:[%s4 + $0x40] sm:$0xf]
  %v171 = vld [vmem:[%s4 + $0x44] sm:$0xf]
  %v172 = vld [vmem:[%s4 + $0x48] sm:$0xf]
  %v173 = vld [vmem:[%s4 + $0x4c] sm:$0xf]
  %v174 = vld [vmem:[%s4 + $0x50] sm:$0xf]
  %v175 = vld [vmem:[%s4 + $0x54] sm:$0xf]
  %v176 = vld [vmem:[%s4 + $0x58] sm:$0xf]
  %v177 = vld [vmem:[%s4 + $0x5c] sm:$0xf]
  %v178 = vld [vmem:[%s4 + $0x60] sm:$0xf]
  %v179 = vld [vmem:[%s4 + $0x64] sm:$0xf]
  %v180 = vld [vmem:[%s4 + $0x68] sm:$0xf]
  %v181 = vld [vmem:[%s4 + $0x6c] sm:$0xf]
  %v182 = vld [vmem:[%s4 + $0x70] sm:$0xf]
  %v183 = vld [vmem:[%s4 + $0x74] sm:$0xf]
  %v184 = vld [vmem:[%s4 + $0x78] sm:$0xf]
  %v185 = vld [vmem:[%s4 + $0x7c] sm:$0xf]
  %v186 = vld [vmem:[%s5] sm:$0x1]
  %v188 = vlaneseq
  %v189 = vshrl.u32 %v188, 7
  %v190 = vsub.s32 0, %v189
  %v191 = vrot.slane %v186, %v190
  %v225 = vunpack.c.l.b16 %v154
  %v226 = vunpack.c.l.b16 %v155
  %v227 = vunpack.c.l.b16 %v156
  %v228 = vunpack.c.l.b16 %v157
  %v229 = vunpack.c.l.b16 %v158
  %v230 = vunpack.c.l.b16 %v159
  %v231 = vunpack.c.l.b16 %v160
  %v232 = vunpack.c.l.b16 %v161
  %v233 = vunpack.c.l.b16 %v162
  %v234 = vunpack.c.l.b16 %v163
  %v235 = vunpack.c.l.b16 %v164
  %v236 = vunpack.c.l.b16 %v165
  %v237 = vunpack.c.l.b16 %v166
  %v238 = vunpack.c.l.b16 %v167
  %v239 = vunpack.c.l.b16 %v168
  %v240 = vunpack.c.l.b16 %v169
  %v241 = vunpack.c.l.b16 %v170
  %v242 = vunpack.c.l.b16 %v171
  %v243 = vunpack.c.l.b16 %v172
  %v244 = vunpack.c.l.b16 %v173
  %v245 = vunpack.c.l.b16 %v174
  %v246 = vunpack.c.l.b16 %v175
  %v247 = vunpack.c.l.b16 %v176
  %v248 = vunpack.c.l.b16 %v177
  %v249 = vunpack.c.l.b16 %v178
  %v250 = vunpack.c.l.b16 %v179
  %v251 = vunpack.c.l.b16 %v180
  %v252 = vunpack.c.l.b16 %v181
  %v253 = vunpack.c.l.b16 %v182
  %v254 = vunpack.c.l.b16 %v183
  %v255 = vunpack.c.l.b16 %v184
  %v256 = vunpack.c.l.b16 %v185
  %v257 = vpack.c.b16 %v226, %v225
  %v258 = vpack.c.b16 %v228, %v227
  %v259 = vpack.c.b16 %v230, %v229
  %v260 = vpack.c.b16 %v232, %v231
  %v261 = vpack.c.b16 %v234, %v233
  %v262 = vpack.c.b16 %v236, %v235
  %v263 = vpack.c.b16 %v238, %v237
  %v264 = vpack.c.b16 %v240, %v239
  %v265 = vpack.c.b16 %v242, %v241
  %v266 = vpack.c.b16 %v244, %v243
  %v267 = vpack.c.b16 %v246, %v245
  %v268 = vpack.c.b16 %v248, %v247
  %v269 = vpack.c.b16 %v250, %v249
  %v270 = vpack.c.b16 %v252, %v251
  %v271 = vpack.c.b16 %v254, %v253
  %v272 = vpack.c.b16 %v256, %v255
  %289 = vmatprep.subr.bf16.mxu0 0
  %290 = vmatpush1.bf16.msra.mxu0 %v257
  %291 = vmatprep.subr.bf16.mxu0 0
  %292 = vmatpush1.bf16.msra.mxu0 %v258
  %293 = vmatprep.subr.bf16.mxu0 0
  %294 = vmatpush1.bf16.msra.mxu0 %v259
  %295 = vmatprep.subr.bf16.mxu0 0
  %296 = vmatpush1.bf16.msra.mxu0 %v260
  %297 = vmatprep.subr.bf16.mxu0 0
  %298 = vmatpush1.bf16.msra.mxu0 %v261
  %299 = vmatprep.subr.bf16.mxu0 0
  %300 = vmatpush1.bf16.msra.mxu0 %v262
  %301 = vmatprep.subr.bf16.mxu0 0
  %302 = vmatpush1.bf16.msra.mxu0 %v263
  %303 = vmatprep.subr.bf16.mxu0 0
  %304 = vmatpush1.bf16.msra.mxu0 %v264
  %305 = vmatprep.subr.bf16.mxu0 0
  %306 = vmatpush1.bf16.msra.mxu0 %v265
  %307 = vmatprep.subr.bf16.mxu0 0
  %308 = vmatpush1.bf16.msra.mxu0 %v266
  %309 = vmatprep.subr.bf16.mxu0 0
  %310 = vmatpush1.bf16.msra.mxu0 %v267
  %311 = vmatprep.subr.bf16.mxu0 0
  %312 = vmatpush1.bf16.msra.mxu0 %v268
  %313 = vmatprep.subr.bf16.mxu0 0
  %314 = vmatpush1.bf16.msra.mxu0 %v269
  %315 = vmatprep.subr.bf16.mxu0 0
  %316 = vmatpush1.bf16.msra.mxu0 %v270
  %317 = vmatprep.subr.bf16.mxu0 0
  %318 = vmatpush1.bf16.msra.mxu0 %v271
  %319 = vmatprep.subr.bf16.mxu0 0
  %320 = vmatpush1.bf16.msra.mxu0 %v272
  %321 = vmatprep.mubr.bf16.mxu0 %v153
  %322 = vmatmul.mubr.bf16.gmra.mrb[0].mxu0 %v152
  %v323 = vpop.f32.mrb[0].mxu0
  %v324 = vadd.f32 %v191, %v323
  %v325 = vpop.f32.mrb[0].mxu0
  %v326 = vpop.f32.mrb[0].mxu0
  %v327 = vpop.f32.mrb[0].mxu0
  %328 = vdwg.mxu0
  %v329 = vpack.c.bf16 %v324, %v324
  %330 = vst [vmem:[%s6] sm:$0xf] %v329
  // Predicated region
  $region26: #{hbmnet_tv_forward.1} parent=0 // pred_check
    _
  $region27: #{hbmnet_tv_forward.1} parent=0 // pred_check_branch
    %332 = sbr.rel (0) target = $region29
  $region28: #{hbmnet_tv_forward.1} parent=0 // pred_region
    _
  $region29: #{hbmnet_tv_forward.1} parent=0 // pred_fallthru
    _
  // Predicated region
  $region30: #{hbmnet_tv_forward.1} parent=0 // pred_check
    _
  $region31: #{hbmnet_tv_forward.1} parent=0 // pred_check_branch
    %334 = sbr.rel (0) target = $region33
  $region32: #{hbmnet_tv_forward.1} parent=0 // pred_region
    _
  $region33: #{hbmnet_tv_forward.1} parent=0 // pred_fallthru
    _

</llo_original>
